<compile_context>
chip_gen: v7x
topology: tpu7x:2x2x1
jax: 0.10.0
libtpu: 0.0.40
codegen_flags: <defaults>
</compile_context>

<pallas_src>
import jax
import jax.numpy as jnp
import numpy as np
from jax import lax
from jax.experimental import pallas as pl
from jax.experimental.pallas import tpu as pltpu

# ---------------- config (small, consistent with the module) ----------------
B = 2            # batch
S = 8            # seq_len
E = 32           # embed_dim
H = 4            # num_heads
DH = E // H      # head_dim
F = 64           # ff_hidden_dim
N = B * S        # collapsed batch*seq rows handled by the single program
HN = H * N       # head-stacked rows
EPS = 1e-5       # nn.LayerNorm default eps
LANES = 128      # lane width of the packed parameter slab
NEG = -1e30      # finite "-inf" for the additive attention mask

# ---- packed-slab row offsets (all lane-0 aligned, all multiples of 8) ----
R_WQ = 0              # (E, E)   linearQ weight
R_W1 = R_WQ + E       # (E, F)   FFN weight 1
R_W2 = R_W1 + E       # (F, E)   FFN weight 2
R_QM = R_W2 + F       # (HN, E)  head mask * softmax scale (for Qbig)
R_OM = R_QM + HN      # (HN, E)  head mask 0/1 (for output merge)
R_AB = R_OM + HN      # (HN, N)  additive causal + block-diagonal batch mask
R_VEC = R_AB + HN     # 7 rows of small vectors (bq, g1, be1, bf1, bf2, g2, be2)
ROWS = R_VEC + 8      # 328 rows total -> 328 x 128 f32 slab (~164 KiB, one DMA)


def _layernorm(y, gamma, beta):
    mean = jnp.mean(y, axis=-1, keepdims=True)
    var = jnp.mean((y - mean) ** 2, axis=-1, keepdims=True)
    return (y - mean) * lax.rsqrt(var + EPS) * gamma + beta


def transformer_block_kernel(x_ref, p_ref, o_ref):
    x = x_ref[...]                                            # (N, E) — all batches at once

    # ---- static, aligned slices out of the single packed parameter slab ----
    wq    = p_ref[R_WQ:R_WQ + E, 0:E]
    w1    = p_ref[R_W1:R_W1 + E, 0:F]
    w2    = p_ref[R_W2:R_W2 + F, 0:E]
    qmask = p_ref[R_QM:R_QM + HN, 0:E]                        # head mask, scale folded in
    omask = p_ref[R_OM:R_OM + HN, 0:E]                        # head mask 0/1
    abias = p_ref[R_AB:R_AB + HN, 0:N]                        # 0 / -1e30 additive mask
    bq  = p_ref[R_VEC + 0:R_VEC + 1, 0:E]
    g1  = p_ref[R_VEC + 1:R_VEC + 2, 0:E]
    be1 = p_ref[R_VEC + 2:R_VEC + 3, 0:E]
    bf1 = p_ref[R_VEC + 3:R_VEC + 4, 0:F]
    bf2 = p_ref[R_VEC + 4:R_VEC + 5, 0:E]
    g2  = p_ref[R_VEC + 5:R_VEC + 6, 0:E]
    be2 = p_ref[R_VEC + 6:R_VEC + 7, 0:E]

    # ---- Q = K = V = linearQ(x), as in the reference module ----
    q = jnp.dot(x, wq, preferred_element_type=jnp.float32) + bq          # (N, E)

    # ---- multi-head attention, heads batched along the sublane (row) axis ----
    q_rep = jnp.concatenate([q] * H, axis=0)                             # (HN, E)
    qbig = q_rep * qmask                                                 # head-masked, pre-scaled

    # all H score matrices in one MXU matmul; contraction on dim 1 (no explicit q.T)
    s = lax.dot_general(qbig, q, dimension_numbers=(((1,), (1,)), ((), ())),
                        preferred_element_type=jnp.float32)              # (HN, N)
    s = s + abias                                                        # causal + batch mask

    # softmax (exact divide — approx reciprocal failed the numeric check)
    m = jnp.max(s, axis=-1, keepdims=True)
    p = jnp.exp(s - m)
    p = p / jnp.sum(p, axis=-1, keepdims=True)

    # all PV products in one MXU matmul, then merge head blocks back to (N, E)
    a = jnp.dot(p, q, preferred_element_type=jnp.float32) * omask        # (HN, E)
    attn = a[0:N]
    for h in range(1, H):                                                # aligned sublane slices
        attn = attn + a[h * N:(h + 1) * N]

    # ---- residual + LayerNorm 1 (dropout = identity) ----
    y = _layernorm(x + attn, g1, be1)

    # ---- feed-forward: Linear -> SiLU -> Linear (sigmoid via EUP tanh) ----
    h1 = jnp.dot(y, w1, preferred_element_type=jnp.float32) + bf1
    h1 = h1 * (0.5 * (1.0 + jnp.tanh(0.5 * h1)))
    ff = jnp.dot(h1, w2, preferred_element_type=jnp.float32) + bf2

    # ---- residual + LayerNorm 2 ----
    o_ref[...] = _layernorm(y + ff, g2, be2)


def pack_params(params):
    """Build the single lane-dense parameter/mask slab ONCE (not per call)."""
    wq, bq, g1, be1, w1, bf1, w2, bf2, g2, be2 = params
    scale = float(E) ** (-0.5)

    slab = np.zeros((ROWS, LANES), np.float32)

    def put(r, a):
        a = np.asarray(a, np.float32)
        a = a.reshape(-1, a.shape[-1])
        slab[r:r + a.shape[0], :a.shape[1]] = a

    put(R_WQ, wq)
    put(R_W1, w1)
    put(R_W2, w2)

    # head/column mask: row block h keeps only head-h columns
    rows = np.arange(HN)
    cols = np.arange(E)
    mask01 = ((cols[None, :] // DH) == (rows[:, None] // N)).astype(np.float32)   # (HN, E)
    put(R_QM, mask01 * scale)      # softmax scale folded in (free)
    put(R_OM, mask01)

    # additive causal + block-diagonal batch mask (keeps collapsed batches separate)
    qn = rows % N
    kn = np.arange(N)
    allowed = ((qn[:, None] // S) == (kn[None, :] // S)) & (kn[None, :] <= qn[:, None])
    put(R_AB, np.where(allowed, 0.0, NEG).astype(np.float32))

    put(R_VEC + 0, bq)
    put(R_VEC + 1, g1)
    put(R_VEC + 2, be1)
    put(R_VEC + 3, bf1)
    put(R_VEC + 4, bf2)
    put(R_VEC + 5, g2)
    put(R_VEC + 6, be2)
    return jnp.asarray(slab)


def transformer_block(x, packed):
    x2 = x.reshape(N, E)            # collapse batch: whole problem fits in VMEM
    vmem = pl.BlockSpec(memory_space=pltpu.MemorySpace.VMEM)
    out = pl.pallas_call(
        transformer_block_kernel,
        out_shape=jax.ShapeDtypeStruct((N, E), jnp.float32),
        in_specs=[vmem, vmem],      # exactly 2 inputs -> 2 DMAs
        out_specs=vmem,
    )(x2, packed)
    return out.reshape(B, S, E)


def reference(x, params):
    """Pure-JAX reference mirroring the PyTorch forward (full-precision matmuls)."""
    wq, bq, g1, be1, w1, bf1, w2, bf2, g2, be2 = params
    scale = float(E) ** (-0.5)
    hi = jax.lax.Precision.HIGHEST
    q = jnp.matmul(x, wq, precision=hi) + bq                   # (B,S,E)
    qh = q.reshape(B, S, H, DH).transpose(0, 2, 1, 3)          # (B,H,S,DH)
    s = jnp.einsum("bhsd,bhtd->bhst", qh, qh, precision=hi) * scale
    causal = jnp.triu(jnp.ones((S, S), bool), k=1)
    s = jnp.where(causal[None, None], -jnp.inf, s)
    p = jax.nn.softmax(s, axis=-1)
    a = jnp.einsum("bhst,bhtd->bhsd", p, qh, precision=hi)
    attn = a.transpose(0, 2, 1, 3).reshape(B, S, E)
    y = _layernorm(x + attn, g1, be1)
    h1 = jnp.matmul(y, w1, precision=hi) + bf1
    h1 = h1 * jax.nn.sigmoid(h1)
    ff = jnp.matmul(h1, w2, precision=hi) + bf2
    return _layernorm(y + ff, g2, be2)


if __name__ == "__main__":
    key = jax.random.PRNGKey(0)
    ks = jax.random.split(key, 8)
    x = jax.random.normal(ks[0], (B, S, E), jnp.float32)

    # Deterministic synthetic parameters (weights stored (in, out)).
    wq = jax.random.normal(ks[1], (E, E), jnp.float32) * 0.1
    bq = jax.random.normal(ks[2], (1, E), jnp.float32) * 0.1
    w1 = jax.random.normal(ks[3], (E, F), jnp.float32) * 0.1
    bf1 = jax.random.normal(ks[4], (1, F), jnp.float32) * 0.1
    w2 = jax.random.normal(ks[5], (F, E), jnp.float32) * 0.1
    bf2 = jax.random.normal(ks[6], (1, E), jnp.float32) * 0.1
    g1 = jnp.ones((1, E), jnp.float32)
    be1 = jnp.zeros((1, E), jnp.float32)
    g2 = jnp.ones((1, E), jnp.float32)
    be2 = jnp.zeros((1, E), jnp.float32)
    params = (wq, bq, g1, be1, w1, bf1, w2, bf2, g2, be2)

    packed = pack_params(params)    # built once, outside the per-call path

    out = jax.block_until_ready(transformer_block(x, packed))
    ref = jax.block_until_ready(reference(x, params))

    np.testing.assert_allclose(np.asarray(out), np.asarray(ref), rtol=2e-3, atol=2e-3)
    print("KERNEL_OK")
</pallas_src>

<mosaic_0001>
module attributes {stable_mosaic.version = 11 : i64} {
  func.func @transformer_block_kernel(%arg0: memref<16x32xf32, #tpu.memory_space<vmem>>, %arg1: memref<328x128xf32, #tpu.memory_space<vmem>>, %arg2: memref<16x32xf32, #tpu.memory_space<vmem>>) attributes {dimension_semantics = [], scalar_prefetch = 0 : i64, scratch_operands = 0 : i64, tpu.core_type = #tpu.core_type<tc>} {
    %c0 = arith.constant 0 : index
    %c0_0 = arith.constant 0 : index
    %0 = vector.load %arg0[%c0, %c0_0] : memref<16x32xf32, #tpu.memory_space<vmem>>, vector<16x32xf32>
    %c0_1 = arith.constant 0 : index
    %c0_2 = arith.constant 0 : index
    %1 = vector.load %arg1[%c0_1, %c0_2] : memref<328x128xf32, #tpu.memory_space<vmem>>, vector<32x32xf32>
    %c32 = arith.constant 32 : index
    %c0_3 = arith.constant 0 : index
    %2 = vector.load %arg1[%c32, %c0_3] : memref<328x128xf32, #tpu.memory_space<vmem>>, vector<32x64xf32>
    %c64 = arith.constant 64 : index
    %c0_4 = arith.constant 0 : index
    %3 = vector.load %arg1[%c64, %c0_4] : memref<328x128xf32, #tpu.memory_space<vmem>>, vector<64x32xf32>
    %c128 = arith.constant 128 : index
    %c0_5 = arith.constant 0 : index
    %4 = vector.load %arg1[%c128, %c0_5] : memref<328x128xf32, #tpu.memory_space<vmem>>, vector<64x32xf32>
    %c192 = arith.constant 192 : index
    %c0_6 = arith.constant 0 : index
    %5 = vector.load %arg1[%c192, %c0_6] : memref<328x128xf32, #tpu.memory_space<vmem>>, vector<64x32xf32>
    %c256 = arith.constant 256 : index
    %c0_7 = arith.constant 0 : index
    %6 = vector.load %arg1[%c256, %c0_7] : memref<328x128xf32, #tpu.memory_space<vmem>>, vector<64x16xf32>
    %c320 = arith.constant 320 : index
    %c0_8 = arith.constant 0 : index
    %7 = vector.load %arg1[%c320, %c0_8] : memref<328x128xf32, #tpu.memory_space<vmem>>, vector<1x32xf32>
    %c321 = arith.constant 321 : index
    %c0_9 = arith.constant 0 : index
    %8 = vector.load %arg1[%c321, %c0_9] : memref<328x128xf32, #tpu.memory_space<vmem>>, vector<1x32xf32>
    %c322 = arith.constant 322 : index
    %c0_10 = arith.constant 0 : index
    %9 = vector.load %arg1[%c322, %c0_10] : memref<328x128xf32, #tpu.memory_space<vmem>>, vector<1x32xf32>
    %c323 = arith.constant 323 : index
    %c0_11 = arith.constant 0 : index
    %10 = vector.load %arg1[%c323, %c0_11] : memref<328x128xf32, #tpu.memory_space<vmem>>, vector<1x64xf32>
    %c324 = arith.constant 324 : index
    %c0_12 = arith.constant 0 : index
    %11 = vector.load %arg1[%c324, %c0_12] : memref<328x128xf32, #tpu.memory_space<vmem>>, vector<1x32xf32>
    %c325 = arith.constant 325 : index
    %c0_13 = arith.constant 0 : index
    %12 = vector.load %arg1[%c325, %c0_13] : memref<328x128xf32, #tpu.memory_space<vmem>>, vector<1x32xf32>
    %c326 = arith.constant 326 : index
    %c0_14 = arith.constant 0 : index
    %13 = vector.load %arg1[%c326, %c0_14] : memref<328x128xf32, #tpu.memory_space<vmem>>, vector<1x32xf32>
    %cst = arith.constant dense<0.000000e+00> : vector<16x32xf32>
    %14 = tpu.matmul %0, %1, %cst {dimension_numbers = #tpu.dot_dimension_numbers<[1], [0], [0], [1], [0, 0, 1, 1], [], []>} : vector<16x32xf32>, vector<32x32xf32>, vector<16x32xf32> -> vector<16x32xf32>
    %15 = vector.broadcast %7 : vector<1x32xf32> to vector<16x32xf32>
    %16 = arith.addf %14, %15 : vector<16x32xf32>
    %17 = tpu.concatenate %16, %16, %16, %16 in 0 : vector<16x32xf32>, vector<16x32xf32>, vector<16x32xf32>, vector<16x32xf32> -> vector<64x32xf32>
    %18 = arith.mulf %17, %4 : vector<64x32xf32>
    %cst_15 = arith.constant dense<0.000000e+00> : vector<64x16xf32>
    %19 = tpu.matmul %18, %16, %cst_15 {dimension_numbers = #tpu.dot_dimension_numbers<[1], [1], [0], [0], [0, 0, 1, 0], [], []>} : vector<64x32xf32>, vector<16x32xf32>, vector<64x16xf32> -> vector<64x16xf32>
    %20 = arith.addf %19, %6 : vector<64x16xf32>
    %cst_16 = arith.constant dense<0xFF800000> : vector<64xf32>
    %21 = vector.multi_reduction <maximumf>, %20, %cst_16 [1] : vector<64x16xf32> to vector<64xf32>
    %22 = vector.shape_cast %21 : vector<64xf32> to vector<64x1xf32>
    %23 = vector.broadcast %22 : vector<64x1xf32> to vector<64x16xf32>
    %24 = arith.subf %20, %23 : vector<64x16xf32>
    %25 = math.exp %24 : vector<64x16xf32>
    %cst_17 = arith.constant dense<0.000000e+00> : vector<64xf32>
    %26 = vector.multi_reduction <add>, %25, %cst_17 [1] : vector<64x16xf32> to vector<64xf32>
    %27 = vector.shape_cast %26 : vector<64xf32> to vector<64x1xf32>
    %28 = vector.broadcast %27 : vector<64x1xf32> to vector<64x16xf32>
    %29 = arith.divf %25, %28 : vector<64x16xf32>
    %cst_18 = arith.constant dense<0.000000e+00> : vector<64x32xf32>
    %30 = tpu.matmul %29, %16, %cst_18 {dimension_numbers = #tpu.dot_dimension_numbers<[1], [0], [0], [1], [0, 0, 1, 1], [], []>} : vector<64x16xf32>, vector<16x32xf32>, vector<64x32xf32> -> vector<64x32xf32>
    %31 = arith.mulf %30, %5 : vector<64x32xf32>
    %32 = vector.extract_strided_slice %31 {offsets = [0, 0], sizes = [16, 32], strides = [1, 1]} : vector<64x32xf32> to vector<16x32xf32>
    %33 = vector.extract_strided_slice %31 {offsets = [16, 0], sizes = [16, 32], strides = [1, 1]} : vector<64x32xf32> to vector<16x32xf32>
    %34 = arith.addf %32, %33 : vector<16x32xf32>
    %35 = vector.extract_strided_slice %31 {offsets = [32, 0], sizes = [16, 32], strides = [1, 1]} : vector<64x32xf32> to vector<16x32xf32>
    %36 = arith.addf %34, %35 : vector<16x32xf32>
    %37 = vector.extract_strided_slice %31 {offsets = [48, 0], sizes = [16, 32], strides = [1, 1]} : vector<64x32xf32> to vector<16x32xf32>
    %38 = arith.addf %36, %37 : vector<16x32xf32>
    %39 = arith.addf %0, %38 : vector<16x32xf32>
    %cst_19 = arith.constant dense<0.000000e+00> : vector<16xf32>
    %40 = vector.multi_reduction <add>, %39, %cst_19 [1] : vector<16x32xf32> to vector<16xf32>
    %41 = vector.shape_cast %40 : vector<16xf32> to vector<16x1xf32>
    %cst_20 = arith.constant 3.200000e+01 : f32
    %42 = vector.broadcast %cst_20 : f32 to vector<16x1xf32>
    %43 = arith.divf %41, %42 : vector<16x1xf32>
    %44 = vector.broadcast %43 : vector<16x1xf32> to vector<16x32xf32>
    %45 = arith.subf %39, %44 : vector<16x32xf32>
    %46 = arith.mulf %45, %45 : vector<16x32xf32>
    %cst_21 = arith.constant dense<0.000000e+00> : vector<16xf32>
    %47 = vector.multi_reduction <add>, %46, %cst_21 [1] : vector<16x32xf32> to vector<16xf32>
    %48 = vector.shape_cast %47 : vector<16xf32> to vector<16x1xf32>
    %cst_22 = arith.constant 3.200000e+01 : f32
    %49 = vector.broadcast %cst_22 : f32 to vector<16x1xf32>
    %50 = arith.divf %48, %49 : vector<16x1xf32>
    %51 = vector.broadcast %43 : vector<16x1xf32> to vector<16x32xf32>
    %52 = arith.subf %39, %51 : vector<16x32xf32>
    %cst_23 = arith.constant 9.99999974E-6 : f32
    %53 = vector.broadcast %cst_23 : f32 to vector<16x1xf32>
    %54 = arith.addf %50, %53 : vector<16x1xf32>
    %55 = math.rsqrt %54 : vector<16x1xf32>
    %56 = vector.broadcast %55 : vector<16x1xf32> to vector<16x32xf32>
    %57 = arith.mulf %52, %56 : vector<16x32xf32>
    %58 = vector.broadcast %8 : vector<1x32xf32> to vector<16x32xf32>
    %59 = arith.mulf %57, %58 : vector<16x32xf32>
    %60 = vector.broadcast %9 : vector<1x32xf32> to vector<16x32xf32>
    %61 = arith.addf %59, %60 : vector<16x32xf32>
    %cst_24 = arith.constant dense<0.000000e+00> : vector<16x64xf32>
    %62 = tpu.matmul %61, %2, %cst_24 {dimension_numbers = #tpu.dot_dimension_numbers<[1], [0], [0], [1], [0, 0, 1, 1], [], []>} : vector<16x32xf32>, vector<32x64xf32>, vector<16x64xf32> -> vector<16x64xf32>
    %63 = vector.broadcast %10 : vector<1x64xf32> to vector<16x64xf32>
    %64 = arith.addf %62, %63 : vector<16x64xf32>
    %cst_25 = arith.constant 5.000000e-01 : f32
    %65 = vector.broadcast %cst_25 : f32 to vector<16x64xf32>
    %66 = arith.mulf %65, %64 : vector<16x64xf32>
    %67 = math.tanh %66 : vector<16x64xf32>
    %cst_26 = arith.constant 1.000000e+00 : f32
    %68 = vector.broadcast %cst_26 : f32 to vector<16x64xf32>
    %69 = arith.addf %68, %67 : vector<16x64xf32>
    %cst_27 = arith.constant 5.000000e-01 : f32
    %70 = vector.broadcast %cst_27 : f32 to vector<16x64xf32>
    %71 = arith.mulf %70, %69 : vector<16x64xf32>
    %72 = arith.mulf %64, %71 : vector<16x64xf32>
    %cst_28 = arith.constant dense<0.000000e+00> : vector<16x32xf32>
    %73 = tpu.matmul %72, %3, %cst_28 {dimension_numbers = #tpu.dot_dimension_numbers<[1], [0], [0], [1], [0, 0, 1, 1], [], []>} : vector<16x64xf32>, vector<64x32xf32>, vector<16x32xf32> -> vector<16x32xf32>
    %74 = vector.broadcast %11 : vector<1x32xf32> to vector<16x32xf32>
    %75 = arith.addf %73, %74 : vector<16x32xf32>
    %76 = arith.addf %61, %75 : vector<16x32xf32>
    %cst_29 = arith.constant dense<0.000000e+00> : vector<16xf32>
    %77 = vector.multi_reduction <add>, %76, %cst_29 [1] : vector<16x32xf32> to vector<16xf32>
    %78 = vector.shape_cast %77 : vector<16xf32> to vector<16x1xf32>
    %cst_30 = arith.constant 3.200000e+01 : f32
    %79 = vector.broadcast %cst_30 : f32 to vector<16x1xf32>
    %80 = arith.divf %78, %79 : vector<16x1xf32>
    %81 = vector.broadcast %80 : vector<16x1xf32> to vector<16x32xf32>
    %82 = arith.subf %76, %81 : vector<16x32xf32>
    %83 = arith.mulf %82, %82 : vector<16x32xf32>
    %cst_31 = arith.constant dense<0.000000e+00> : vector<16xf32>
    %84 = vector.multi_reduction <add>, %83, %cst_31 [1] : vector<16x32xf32> to vector<16xf32>
    %85 = vector.shape_cast %84 : vector<16xf32> to vector<16x1xf32>
    %cst_32 = arith.constant 3.200000e+01 : f32
    %86 = vector.broadcast %cst_32 : f32 to vector<16x1xf32>
    %87 = arith.divf %85, %86 : vector<16x1xf32>
    %88 = vector.broadcast %80 : vector<16x1xf32> to vector<16x32xf32>
    %89 = arith.subf %76, %88 : vector<16x32xf32>
    %cst_33 = arith.constant 9.99999974E-6 : f32
    %90 = vector.broadcast %cst_33 : f32 to vector<16x1xf32>
    %91 = arith.addf %87, %90 : vector<16x1xf32>
    %92 = math.rsqrt %91 : vector<16x1xf32>
    %93 = vector.broadcast %92 : vector<16x1xf32> to vector<16x32xf32>
    %94 = arith.mulf %89, %93 : vector<16x32xf32>
    %95 = vector.broadcast %12 : vector<1x32xf32> to vector<16x32xf32>
    %96 = arith.mulf %94, %95 : vector<16x32xf32>
    %97 = vector.broadcast %13 : vector<1x32xf32> to vector<16x32xf32>
    %98 = arith.addf %96, %97 : vector<16x32xf32>
    %c0_34 = arith.constant 0 : index
    %c0_35 = arith.constant 0 : index
    %99 = vector.load %arg2[%c0_34, %c0_35] : memref<16x32xf32, #tpu.memory_space<vmem>>, vector<16x32xf32>
    tpu.vector_store %arg2[%c0_34, %c0_35], %98 {strides = array<i32>} : memref<16x32xf32, #tpu.memory_space<vmem>>, vector<16x32xf32>,
    return
  }
}

</mosaic_0001>

<llo_original>
// kernel: tpu_custom_call.1
$region0: #{tpu_custom_call.1}
  #allocation0 [shape = 'u32[]', space=smem, size = 0x4, offset = 0x4, fixed_abs, tag = 'smem constant byte address 0x4 - core index']
  #allocation1 [shape = 'u32[144,128]{1,0:T(1,128)}', space=vmem, size = 0x12000, scoped, tag = 'internal scratch']
  %s0 = inlined_call_operand.hbm [shape: f32[16,32], index: 0, kind: input, shape index: {}]
  %s1 = inlined_call_operand.hbm [shape: f32[328,128], index: 1, kind: input, shape index: {}]
  %s2 = inlined_call_operand.hbm [shape: f32[16,32], index: 2, kind: output, shape index: {}]
  %s3 = sld [smem:[#allocation0]]
  $region26: #{tpu_custom_call.1} parent=0
    _
  %s5 = ssub.s32 1, %s3
  %s6 = scalar_select 0, %s5, %s3
  $region1: #{tpu_custom_call.1} parent=0
    #allocation2 [shape = 'u8[8192]{0}', space=vmem, size = 0x2000, scoped, tag = 'input window, operand 0, single buffered']
    #allocation3 [shape = 's32[1]{0}', space=sflag, size = 0x4, scoped, tag = 'scoped memory for tpu_custom_call.1']
    #allocation4 [shape = 's32[1]{0}', space=sflag, size = 0x4, scoped, tag = 'scoped memory for tpu_custom_call.1']
    #allocation5 [shape = 'u8[167936]{0}', space=vmem, size = 0x29000, scoped, tag = 'input window, operand 1, single buffered']
    #allocation6 [shape = 's32[1]{0}', space=sflag, size = 0x4, scoped, tag = 'scoped memory for tpu_custom_call.1']
    #allocation7 [shape = 'u8[8192]{0}', space=vmem, size = 0x2000, scoped, tag = 'output window, operand 0, single buffered']
    %7 = vsyncpa [#allocation3], 0
    %8 = vsyncpa [#allocation6], 0
    %9 = vsyncpa [#allocation4], 0
    // Predicated region
    $region2: #{tpu_custom_call.1} parent=1 // pred_check
      _
    $region3: #{tpu_custom_call.1} parent=1 // pred_check_branch
      %11 = sbr.rel (0) target = $region5
    $region4: #{tpu_custom_call.1} parent=1 // pred_region
      %s13 = ssub.s32 256, 256
      %14 = vsyncadd [#allocation3], %s13
      %s15 = sshll.u32 [#allocation2], 4
      %s16 = int_to_ptr.vmem [resolvable:$true] %s15
      %21 = dma.hbm_to_vmem [thread:$0]  %s0, 256, %s16, [#allocation3], 128, 128, 8
    $region5: #{tpu_custom_call.1} parent=1 // pred_fallthru
      _
    // Predicated region
    $region6: #{tpu_custom_call.1} parent=1 // pred_check
      _
    $region7: #{tpu_custom_call.1} parent=1 // pred_check_branch
      %23 = sbr.rel (0) target = $region9
    $region8: #{tpu_custom_call.1} parent=1 // pred_region
      %s25 = ssub.s32 5248, 5248
      %26 = vsyncadd [#allocation6], %s25
      %s27 = sshll.u32 [#allocation5], 4
      %s28 = int_to_ptr.vmem [resolvable:$true] %s27
      %33 = dma.hbm_to_vmem [thread:$0]  %s1, 5248, %s28, [#allocation6], 128, 128, 8
    $region9: #{tpu_custom_call.1} parent=1 // pred_fallthru
      _
    // Predicated region
    $region10: #{tpu_custom_call.1} parent=1 // pred_check
      _
    $region11: #{tpu_custom_call.1} parent=1 // pred_check_branch
      %35 = sbr.rel (0) target = $region13
    $region12: #{tpu_custom_call.1} parent=1 // pred_region
      %36 = dma.done [#allocation3], 256
    $region13: #{tpu_custom_call.1} parent=1 // pred_fallthru
      _
    // Predicated region
    $region14: #{tpu_custom_call.1} parent=1 // pred_check
      _
    $region15: #{tpu_custom_call.1} parent=1 // pred_check_branch
      %38 = sbr.rel (0) target = $region17
    $region16: #{tpu_custom_call.1} parent=1 // pred_region
      %39 = dma.done [#allocation6], 5248
    $region17: #{tpu_custom_call.1} parent=1 // pred_fallthru
      _
    %v40 = vld [vmem:[#allocation2] sm:$0xff]
    %v41 = vld [vmem:[#allocation2 + $0x8] sm:$0xff]
    %v42 = vld [vmem:[#allocation5] sm:$0xff]
    %v43 = vld [vmem:[#allocation5 + $0x8] sm:$0xff]
    %v44 = vld [vmem:[#allocation5 + $0x10] sm:$0xff]
    %v45 = vld [vmem:[#allocation5 + $0x18] sm:$0xff]
    %v46 = vld [vmem:[#allocation5 + $0x20] sm:$0xff]
    %v47 = vld [vmem:[#allocation5 + $0x28] sm:$0xff]
    %v48 = vld [vmem:[#allocation5 + $0x30] sm:$0xff]
    %v49 = vld [vmem:[#allocation5 + $0x38] sm:$0xff]
    %v50 = vld [vmem:[#allocation5 + $0x40] sm:$0xff]
    %v51 = vld [vmem:[#allocation5 + $0x48] sm:$0xff]
    %v52 = vld [vmem:[#allocation5 + $0x50] sm:$0xff]
    %v53 = vld [vmem:[#allocation5 + $0x58] sm:$0xff]
    %v54 = vld [vmem:[#allocation5 + $0x60] sm:$0xff]
    %v55 = vld [vmem:[#allocation5 + $0x68] sm:$0xff]
    %v56 = vld [vmem:[#allocation5 + $0x70] sm:$0xff]
    %v57 = vld [vmem:[#allocation5 + $0x78] sm:$0xff]
    %v58 = vld [vmem:[#allocation5 + $0x80] sm:$0xff]
    %v59 = vld [vmem:[#allocation5 + $0x88] sm:$0xff]
    %v60 = vld [vmem:[#allocation5 + $0x90] sm:$0xff]
    %v61 = vld [vmem:[#allocation5 + $0x98] sm:$0xff]
    %v62 = vld [vmem:[#allocation5 + $0xa0] sm:$0xff]
    %v63 = vld [vmem:[#allocation5 + $0xa8] sm:$0xff]
    %v64 = vld [vmem:[#allocation5 + $0xb0] sm:$0xff]
    %v65 = vld [vmem:[#allocation5 + $0xb8] sm:$0xff]
    %v66 = vld [vmem:[#allocation5 + $0xc0] sm:$0xff]
    %v67 = vld [vmem:[#allocation5 + $0xc8] sm:$0xff]
    %v68 = vld [vmem:[#allocation5 + $0xd0] sm:$0xff]
    %v69 = vld [vmem:[#allocation5 + $0xd8] sm:$0xff]
    %v70 = vld [vmem:[#allocation5 + $0xe0] sm:$0xff]
    %v71 = vld [vmem:[#allocation5 + $0xe8] sm:$0xff]
    %v72 = vld [vmem:[#allocation5 + $0xf0] sm:$0xff]
    %v73 = vld [vmem:[#allocation5 + $0xf8] sm:$0xff]
    %v74 = vld [vmem:[#allocation5 + $0x100] sm:$0xff]
    %v75 = vld [vmem:[#allocation5 + $0x108] sm:$0xff]
    %v76 = vld [vmem:[#allocation5 + $0x110] sm:$0xff]
    %v77 = vld [vmem:[#allocation5 + $0x118] sm:$0xff]
    %v78 = vld [vmem:[#allocation5 + $0x120] sm:$0xff]
    %v79 = vld [vmem:[#allocation5 + $0x128] sm:$0xff]
    %v80 = vld [vmem:[#allocation5 + $0x130] sm:$0xff]
    %v81 = vld [vmem:[#allocation5 + $0x138] sm:$0xff]
    %v82 = vld [vmem:[#allocation5 + $0x140] sm:$0x1]
    %v83 = vld [vmem:[#allocation5 + $0x141] sm:$0x1]
    %v84 = vld [vmem:[#allocation5 + $0x142] sm:$0x1]
    %v85 = vld [vmem:[#allocation5 + $0x143] sm:$0x1]
    %v86 = vld [vmem:[#allocation5 + $0x144] sm:$0x1]
    %v87 = vld [vmem:[#allocation5 + $0x145] sm:$0x1]
    %v88 = vld [vmem:[#allocation5 + $0x146] sm:$0x1]
    %v89 = vlaneseq
    %v90 = vshrl.u32 %v89, 7
    %v91 = vsub.s32 0, %v90
    %v92 = vrot.slane %v82, %v91
    %vm93 = vcmask 261120
    %v95 = vsel %vm93, %v40, 0
    %v98 = vsel %vm93, %v41, 0
    %100 = vmatprep.subr.mxu0 0.0
    %101 = vmatpush1.msra.mxu0 %v42
    %102 = vmatprep.subr.mxu0 0.0
    %103 = vmatpush1.msra.mxu0 %v43
    %104 = vmatprep.subr.mxu0 0.0
    %105 = vmatpush1.msra.mxu0 %v44
    %106 = vmatprep.subr.mxu0 0.0
    %107 = vmatpush1.msra.mxu0 %v45
    %108 = vmatprep.subr.mxu0 0.0
    %109 = vmatpush1.msra.mxu0 0.0
    %110 = vmatprep.subr.mxu0 0.0
    %111 = vmatpush1.msra.mxu0 0.0
    %112 = vmatprep.subr.mxu0 0.0
    %113 = vmatpush1.msra.mxu0 0.0
    %114 = vmatprep.subr.mxu0 0.0
    %115 = vmatpush1.msra.mxu0 0.0
    %116 = vmatprep.subr.mxu0 0.0
    %117 = vmatpush1.msra.mxu0 0.0
    %118 = vmatprep.subr.mxu0 0.0
    %119 = vmatpush1.msra.mxu0 0.0
    %120 = vmatprep.subr.mxu0 0.0
    %121 = vmatpush1.msra.mxu0 0.0
    %122 = vmatprep.subr.mxu0 0.0
    %123 = vmatpush1.msra.mxu0 0.0
    %124 = vmatprep.subr.mxu0 0.0
    %125 = vmatpush1.msra.mxu0 0.0
    %126 = vmatprep.subr.mxu0 0.0
    %127 = vmatpush1.msra.mxu0 0.0
    %128 = vmatprep.subr.mxu0 0.0
    %129 = vmatpush1.msra.mxu0 0.0
    %130 = vmatprep.subr.mxu0 0.0
    %131 = vmatpush1.msra.mxu0 0.0
    %132 = vmatprep.subr.mxu0 0.0
    %133 = vmatpush1.msra.mxu0 0.0
    %134 = vmatprep.subr.mxu0 0.0
    %135 = vmatpush1.msra.mxu0 0.0
    %136 = vmatprep.subr.mxu0 0.0
    %137 = vmatpush1.msra.mxu0 0.0
    %138 = vmatprep.subr.mxu0 0.0
    %139 = vmatpush1.msra.mxu0 0.0
    %140 = vmatprep.subr.mxu0 0.0
    %141 = vmatpush1.msra.mxu0 0.0
    %142 = vmatprep.subr.mxu0 0.0
    %143 = vmatpush1.msra.mxu0 0.0
    %144 = vmatprep.subr.mxu0 0.0
    %145 = vmatpush1.msra.mxu0 0.0
    %146 = vmatprep.subr.mxu0 0.0
    %147 = vmatpush1.msra.mxu0 0.0
    %148 = vmatprep.subr.mxu0 0.0
    %149 = vmatpush1.msra.mxu0 0.0
    %150 = vmatprep.subr.mxu0 0.0
    %151 = vmatpush1.msra.mxu0 0.0
    %152 = vmatprep.subr.mxu0 0.0
    %153 = vmatpush1.msra.mxu0 0.0
    %154 = vmatprep.subr.mxu0 0.0
    %155 = vmatpush1.msra.mxu0 0.0
    %156 = vmatprep.subr.mxu0 0.0
    %157 = vmatpush1.msra.mxu0 0.0
    %158 = vmatprep.subr.mxu0 0.0
    %159 = vmatpush1.msra.mxu0 0.0
    %160 = vmatprep.subr.mxu0 0.0
    %161 = vmatpush1.msra.mxu0 0.0
    %162 = vmatprep.subr.mxu0 0.0
    %163 = vmatpush1.msra.mxu0 0.0
    %164 = vmatprep.mubr.f32.mxu0 0.0
    %165 = vmatmul.mubr.f32.gmra.mrb[0].mxu0 %v95
    %v166 = vpop.f32.mrb[0].mxu0
    %v167 = vadd.f32 %v92, %v166
    %v168 = vpop.f32.mrb[0].mxu0
    %169 = vmatprep.mubr.f32.mxu0 0.0
    %170 = vmatmul.mubr.f32.gmra.mrb[0].mxu0 %v98
    %v171 = vpop.f32.mrb[0].mxu0
    %v172 = vadd.f32 %v92, %v171
    %v173 = vpop.f32.mrb[0].mxu0
    %174 = vdwg.mxu0
    %v175 = vmul.f32 %v167, %v58
    %v176 = vmul.f32 %v172, %v59
    %v177 = vmul.f32 %v167, %v60
    %v178 = vmul.f32 %v172, %v61
    %v179 = vmul.f32 %v167, %v62
    %v180 = vmul.f32 %v172, %v63
    %v181 = vmul.f32 %v167, %v64
    %v182 = vmul.f32 %v172, %v65
    %v184 = vsel %vm93, %v175, 0
    %v187 = vsel %vm93, %v176, 0
    %v190 = vsel %vm93, %v177, 0
    %v193 = vsel %vm93, %v178, 0
    %v196 = vsel %vm93, %v179, 0
    %v199 = vsel %vm93, %v180, 0
    %v202 = vsel %vm93, %v181, 0
    %v205 = vsel %vm93, %v182, 0
    %v208 = vsel %vm93, %v167, 0
    %v211 = vsel %vm93, %v172, 0
    %213 = vmatprep.subr.mxu0 0.0
    %214 = vmatpush1.xpose.msra.mxu0 %v208
    %215 = vmatprep.subr.mxu0 0.0
    %216 = vmatpush1.xpose.msra.mxu0 %v211
    %217 = vmatprep.subr.mxu0 0.0
    %218 = vmatpush1.xpose.msra.mxu0 0.0
    %219 = vmatprep.subr.mxu0 0.0
    %220 = vmatpush1.xpose.msra.mxu0 0.0
    %221 = vmatprep.subr.mxu0 0.0
    %222 = vmatpush1.xpose.msra.mxu0 0.0
    %223 = vmatprep.subr.mxu0 0.0
    %224 = vmatpush1.xpose.msra.mxu0 0.0
    %225 = vmatprep.subr.mxu0 0.0
    %226 = vmatpush1.xpose.msra.mxu0 0.0
    %227 = vmatprep.subr.mxu0 0.0
    %228 = vmatpush1.xpose.msra.mxu0 0.0
    %229 = vmatprep.subr.mxu0 0.0
    %230 = vmatpush1.xpose.msra.mxu0 0.0
    %231 = vmatprep.subr.mxu0 0.0
    %232 = vmatpush1.xpose.msra.mxu0 0.0
    %233 = vmatprep.subr.mxu0 0.0
    %234 = vmatpush1.xpose.msra.mxu0 0.0
    %235 = vmatprep.subr.mxu0 0.0
    %236 = vmatpush1.xpose.msra.mxu0 0.0
    %237 = vmatprep.subr.mxu0 0.0
    %238 = vmatpush1.xpose.msra.mxu0 0.0
    %239 = vmatprep.subr.mxu0 0.0
    %240 = vmatpush1.xpose.msra.mxu0 0.0
    %241 = vmatprep.subr.mxu0 0.0
    %242 = vmatpush1.xpose.msra.mxu0 0.0
    %243 = vmatprep.subr.mxu0 0.0
    %244 = vmatpush1.xpose.msra.mxu0 0.0
    %245 = vmatprep.subr.mxu0 0.0
    %246 = vmatpush1.xpose.msra.mxu0 0.0
    %247 = vmatprep.subr.mxu0 0.0
    %248 = vmatpush1.xpose.msra.mxu0 0.0
    %249 = vmatprep.subr.mxu0 0.0
    %250 = vmatpush1.xpose.msra.mxu0 0.0
    %251 = vmatprep.subr.mxu0 0.0
    %252 = vmatpush1.xpose.msra.mxu0 0.0
    %253 = vmatprep.subr.mxu0 0.0
    %254 = vmatpush1.xpose.msra.mxu0 0.0
    %255 = vmatprep.subr.mxu0 0.0
    %256 = vmatpush1.xpose.msra.mxu0 0.0
    %257 = vmatprep.subr.mxu0 0.0
    %258 = vmatpush1.xpose.msra.mxu0 0.0
    %259 = vmatprep.subr.mxu0 0.0
    %260 = vmatpush1.xpose.msra.mxu0 0.0
    %261 = vmatprep.subr.mxu0 0.0
    %262 = vmatpush1.xpose.msra.mxu0 0.0
    %263 = vmatprep.subr.mxu0 0.0
    %264 = vmatpush1.xpose.msra.mxu0 0.0
    %265 = vmatprep.subr.mxu0 0.0
    %266 = vmatpush1.xpose.msra.mxu0 0.0
    %267 = vmatprep.subr.mxu0 0.0
    %268 = vmatpush1.xpose.msra.mxu0 0.0
    %269 = vmatprep.subr.mxu0 0.0
    %270 = vmatpush1.xpose.msra.mxu0 0.0
    %271 = vmatprep.subr.mxu0 0.0
    %272 = vmatpush1.xpose.msra.mxu0 0.0
    %273 = vmatprep.subr.mxu0 0.0
    %274 = vmatpush1.xpose.msra.mxu0 0.0
    %275 = vmatprep.subr.mxu0 0.0
    %276 = vmatpush1.xpose.msra.mxu0 0.0
    %277 = vmatprep.mubr.f32.mxu0 0.0
    %278 = vmatmul.mubr.f32.gmra.mrb[0].mxu0 %v184
    %v279 = vpop.f32.mrb[0].mxu0
    %v280 = vadd.f32 %v74, %v279
    %v281 = vpop.f32.mrb[0].mxu0
    %282 = vmatprep.mubr.f32.mxu0 0.0
    %283 = vmatmul.mubr.f32.gmra.mrb[0].mxu0 %v187
    %v284 = vpop.f32.mrb[0].mxu0
    %v285 = vadd.f32 %v75, %v284
    %v286 = vpop.f32.mrb[0].mxu0
    %287 = vmatprep.mubr.f32.mxu0 0.0
    %288 = vmatmul.mubr.f32.gmra.mrb[0].mxu0 %v190
    %v289 = vpop.f32.mrb[0].mxu0
    %v290 = vadd.f32 %v76, %v289
    %v291 = vpop.f32.mrb[0].mxu0
    %292 = vmatprep.mubr.f32.mxu0 0.0
    %293 = vmatmul.mubr.f32.gmra.mrb[0].mxu0 %v193
    %v294 = vpop.f32.mrb[0].mxu0
    %v295 = vadd.f32 %v77, %v294
    %v296 = vpop.f32.mrb[0].mxu0
    %297 = vmatprep.mubr.f32.mxu0 0.0
    %298 = vmatmul.mubr.f32.gmra.mrb[0].mxu0 %v196
    %v299 = vpop.f32.mrb[0].mxu0
    %v300 = vadd.f32 %v78, %v299
    %v301 = vpop.f32.mrb[0].mxu0
    %302 = vmatprep.mubr.f32.mxu0 0.0
    %303 = vmatmul.mubr.f32.gmra.mrb[0].mxu0 %v199
    %v304 = vpop.f32.mrb[0].mxu0
    %v305 = vadd.f32 %v79, %v304
    %v306 = vpop.f32.mrb[0].mxu0
    %307 = vmatprep.mubr.f32.mxu0 0.0
    %308 = vmatmul.mubr.f32.gmra.mrb[0].mxu0 %v202
    %v309 = vpop.f32.mrb[0].mxu0
    %v310 = vadd.f32 %v80, %v309
    %v311 = vpop.f32.mrb[0].mxu0
    %312 = vmatprep.mubr.f32.mxu0 0.0
    %313 = vmatmul.mubr.f32.gmra.mrb[0].mxu0 %v205
    %v314 = vpop.f32.mrb[0].mxu0
    %v315 = vadd.f32 %v81, %v314
    %v316 = vpop.f32.mrb[0].mxu0
    %317 = vdwg.mxu0
    %vm318 = vcmask 130048
    %v319 = vsel %vm318, %v280, -inf
    %320 = vmax.xlane.f32.xlu0 %v319
    %v321 = vpop.xlane.xlu0 %320
    %v322 = vsel %vm318, %v285, -inf
    %323 = vmax.xlane.f32.xlu0 %v322
    %v324 = vpop.xlane.xlu0 %323
    %v325 = vsel %vm318, %v290, -inf
    %326 = vmax.xlane.f32.xlu0 %v325
    %v327 = vpop.xlane.xlu0 %326
    %v328 = vsel %vm318, %v295, -inf
    %329 = vmax.xlane.f32.xlu0 %v328
    %v330 = vpop.xlane.xlu0 %329
    %v331 = vsel %vm318, %v300, -inf
    %332 = vmax.xlane.f32.xlu0 %v331
    %v333 = vpop.xlane.xlu0 %332
    %v334 = vsel %vm318, %v305, -inf
    %335 = vmax.xlane.f32.xlu0 %v334
    %v336 = vpop.xlane.xlu0 %335
    %v337 = vsel %vm318, %v310, -inf
    %338 = vmax.xlane.f32.xlu0 %v337
    %v339 = vpop.xlane.xlu0 %338
    %v340 = vsel %vm318, %v315, -inf
    %341 = vmax.xlane.f32.xlu0 %v340
    %v342 = vpop.xlane.xlu0 %341
    %v343 = vsub.f32 %v280, %v321
    %v344 = vsub.f32 %v285, %v324
    %v345 = vsub.f32 %v290, %v327
    %v346 = vsub.f32 %v295, %v330
    %v347 = vsub.f32 %v300, %v333
    %v348 = vsub.f32 %v305, %v336
    %v349 = vsub.f32 %v310, %v339
    %v350 = vsub.f32 %v315, %v342
    %v351 = vmul.f32 %v343, 1.442695
    %v352 = vpow.pop %v351
    %v353 = vmul.f32 %v344, 1.442695
    %v354 = vpow.pop %v353
    %v355 = vmul.f32 %v345, 1.442695
    %v356 = vpow.pop %v355
    %v357 = vmul.f32 %v346, 1.442695
    %v358 = vpow.pop %v357
    %v359 = vmul.f32 %v347, 1.442695
    %v360 = vpow.pop %v359
    %v361 = vmul.f32 %v348, 1.442695
    %v362 = vpow.pop %v361
    %v363 = vmul.f32 %v349, 1.442695
    %v364 = vpow.pop %v363
    %v365 = vmul.f32 %v350, 1.442695
    %v366 = vpow.pop %v365
    %v367 = vsel %vm318, %v352, 0.0
    %368 = vadd.xlane.f32.xlu0 %v367
    %v369 = vpop.xlane.xlu0 %368
    %v370 = vsel %vm318, %v354, 0.0
    %371 = vadd.xlane.f32.xlu0 %v370
    %v372 = vpop.xlane.xlu0 %371
    %v373 = vsel %vm318, %v356, 0.0
    %374 = vadd.xlane.f32.xlu0 %v373
    %v375 = vpop.xlane.xlu0 %374
    %v376 = vsel %vm318, %v358, 0.0
    %377 = vadd.xlane.f32.xlu0 %v376
    %v378 = vpop.xlane.xlu0 %377
    %v379 = vsel %vm318, %v360, 0.0
    %380 = vadd.xlane.f32.xlu0 %v379
    %v381 = vpop.xlane.xlu0 %380
    %v382 = vsel %vm318, %v362, 0.0
    %383 = vadd.xlane.f32.xlu0 %v382
    %v384 = vpop.xlane.xlu0 %383
    %v385 = vsel %vm318, %v364, 0.0
    %386 = vadd.xlane.f32.xlu0 %v385
    %v387 = vpop.xlane.xlu0 %386
    %v388 = vsel %vm318, %v366, 0.0
    %389 = vadd.xlane.f32.xlu0 %v388
    %v390 = vpop.xlane.xlu0 %389
    %v391 = vrcp.pop %v369
    %v392 = vmul.f32 %v352, %v391
    %v393 = vrcp.pop %v372
    %v394 = vmul.f32 %v354, %v393
    %v395 = vrcp.pop %v375
    %v396 = vmul.f32 %v356, %v395
    %v397 = vrcp.pop %v378
    %v398 = vmul.f32 %v358, %v397
    %v399 = vrcp.pop %v381
    %v400 = vmul.f32 %v360, %v399
    %v401 = vrcp.pop %v384
    %v402 = vmul.f32 %v362, %v401
    %v403 = vrcp.pop %v387
    %v404 = vmul.f32 %v364, %v403
    %v405 = vrcp.pop %v390
    %v406 = vmul.f32 %v366, %v405
    %v408 = vsel %vm318, %v392, 0
    %v411 = vsel %vm318, %v394, 0
    %v414 = vsel %vm318, %v396, 0
    %v417 = vsel %vm318, %v398, 0
    %v420 = vsel %vm318, %v400, 0
    %v423 = vsel %vm318, %v402, 0
    %v426 = vsel %vm318, %v404, 0
    %v429 = vsel %vm318, %v406, 0
    %431 = vmatprep.subr.mxu0 0.0
    %432 = vmatpush1.msra.mxu0 %v167
    %433 = vmatprep.subr.mxu0 0.0
    %434 = vmatpush1.msra.mxu0 %v172
    %435 = vmatprep.subr.mxu0 0.0
    %436 = vmatpush1.msra.mxu0 0.0
    %437 = vmatprep.subr.mxu0 0.0
    %438 = vmatpush1.msra.mxu0 0.0
    %439 = vmatprep.subr.mxu0 0.0
    %440 = vmatpush1.msra.mxu0 0.0
    %441 = vmatprep.subr.mxu0 0.0
    %442 = vmatpush1.msra.mxu0 0.0
    %443 = vmatprep.subr.mxu0 0.0
    %444 = vmatpush1.msra.mxu0 0.0
    %445 = vmatprep.subr.mxu0 0.0
    %446 = vmatpush1.msra.mxu0 0.0
    %447 = vmatprep.subr.mxu0 0.0
    %448 = vmatpush1.msra.mxu0 0.0
    %449 = vmatprep.subr.mxu0 0.0
    %450 = vmatpush1.msra.mxu0 0.0
    %451 = vmatprep.subr.mxu0 0.0
    %452 = vmatpush1.msra.mxu0 0.0
    %453 = vmatprep.subr.mxu0 0.0
    %454 = vmatpush1.msra.mxu0 0.0
    %455 = vmatprep.subr.mxu0 0.0
    %456 = vmatpush1.msra.mxu0 0.0
    %457 = vmatprep.subr.mxu0 0.0
    %458 = vmatpush1.msra.mxu0 0.0
    %459 = vmatprep.subr.mxu0 0.0
    %460 = vmatpush1.msra.mxu0 0.0
    %461 = vmatprep.subr.mxu0 0.0
    %462 = vmatpush1.msra.mxu0 0.0
    %463 = vmatprep.subr.mxu0 0.0
    %464 = vmatpush1.msra.mxu0 0.0
    %465 = vmatprep.subr.mxu0 0.0
    %466 = vmatpush1.msra.mxu0 0.0
    %467 = vmatprep.subr.mxu0 0.0
    %468 = vmatpush1.msra.mxu0 0.0
    %469 = vmatprep.subr.mxu0 0.0
    %470 = vmatpush1.msra.mxu0 0.0
    %471 = vmatprep.subr.mxu0 0.0
    %472 = vmatpush1.msra.mxu0 0.0
    %473 = vmatprep.subr.mxu0 0.0
    %474 = vmatpush1.msra.mxu0 0.0
    %475 = vmatprep.subr.mxu0 0.0
    %476 = vmatpush1.msra.mxu0 0.0
    %477 = vmatprep.subr.mxu0 0.0
    %478 = vmatpush1.msra.mxu0 0.0
    %479 = vmatprep.subr.mxu0 0.0
    %480 = vmatpush1.msra.mxu0 0.0
    %481 = vmatprep.subr.mxu0 0.0
    %482 = vmatpush1.msra.mxu0 0.0
    %483 = vmatprep.subr.mxu0 0.0
    %484 = vmatpush1.msra.mxu0 0.0
    %485 = vmatprep.subr.mxu0 0.0
    %486 = vmatpush1.msra.mxu0 0.0
    %487 = vmatprep.subr.mxu0 0.0
    %488 = vmatpush1.msra.mxu0 0.0
    %489 = vmatprep.subr.mxu0 0.0
    %490 = vmatpush1.msra.mxu0 0.0
    %491 = vmatprep.subr.mxu0 0.0
    %492 = vmatpush1.msra.mxu0 0.0
    %493 = vmatprep.subr.mxu0 0.0
    %494 = vmatpush1.msra.mxu0 0.0
    %495 = vmatprep.mubr.f32.mxu0 0.0
    %496 = vmatmul.mubr.f32.gmra.mrb[0].mxu0 %v408
    %v497 = vpop.f32.mrb[0].mxu0
    %v498 = vadd.f32 0.0, %v497
    %v499 = vpop.f32.mrb[0].mxu0
    %500 = vmatprep.mubr.f32.mxu0 0.0
    %501 = vmatmul.mubr.f32.gmra.mrb[0].mxu0 %v411
    %v502 = vpop.f32.mrb[0].mxu0
    %v503 = vadd.f32 0.0, %v502
    %v504 = vpop.f32.mrb[0].mxu0
    %505 = vmatprep.mubr.f32.mxu0 0.0
    %506 = vmatmul.mubr.f32.gmra.mrb[0].mxu0 %v414
    %v507 = vpop.f32.mrb[0].mxu0
    %v508 = vadd.f32 0.0, %v507
    %v509 = vpop.f32.mrb[0].mxu0
    %510 = vmatprep.mubr.f32.mxu0 0.0
    %511 = vmatmul.mubr.f32.gmra.mrb[0].mxu0 %v417
    %v512 = vpop.f32.mrb[0].mxu0
    %v513 = vadd.f32 0.0, %v512
    %v514 = vpop.f32.mrb[0].mxu0
    %515 = vmatprep.mubr.f32.mxu0 0.0
    %516 = vmatmul.mubr.f32.gmra.mrb[0].mxu0 %v420
    %v517 = vpop.f32.mrb[0].mxu0
    %v518 = vadd.f32 0.0, %v517
    %v519 = vpop.f32.mrb[0].mxu0
    %520 = vmatprep.mubr.f32.mxu0 0.0
    %521 = vmatmul.mubr.f32.gmra.mrb[0].mxu0 %v423
    %v522 = vpop.f32.mrb[0].mxu0
    %v523 = vadd.f32 0.0, %v522
    %v524 = vpop.f32.mrb[0].mxu0
    %525 = vmatprep.mubr.f32.mxu0 0.0
    %526 = vmatmul.mubr.f32.gmra.mrb[0].mxu0 %v426
    %v527 = vpop.f32.mrb[0].mxu0
    %v528 = vadd.f32 0.0, %v527
    %v529 = vpop.f32.mrb[0].mxu0
    %530 = vmatprep.mubr.f32.mxu0 0.0
    %531 = vmatmul.mubr.f32.gmra.mrb[0].mxu0 %v429
    %v532 = vpop.f32.mrb[0].mxu0
    %v533 = vadd.f32 0.0, %v532
    %v534 = vpop.f32.mrb[0].mxu0
    %535 = vdwg.mxu0
    %v536 = vmul.f32 %v498, %v66
    %v537 = vmul.f32 %v503, %v67
    %v538 = vmul.f32 %v508, %v68
    %v539 = vmul.f32 %v513, %v69
    %v540 = vmul.f32 %v518, %v70
    %v541 = vmul.f32 %v523, %v71
    %v542 = vmul.f32 %v528, %v72
    %v543 = vmul.f32 %v533, %v73
    %v544 = vadd.f32 %v536, %v538
    %v545 = vadd.f32 %v537, %v539
    %v546 = vadd.f32 %v544, %v540
    %v547 = vadd.f32 %v545, %v541
    %v548 = vadd.f32 %v546, %v542
    %v549 = vadd.f32 %v547, %v543
    %v550 = vadd.f32 %v40, %v548
    %v551 = vadd.f32 %v41, %v549
    %v552 = vsel %vm93, %v550, 0.0
    %553 = vadd.xlane.f32.xlu0 %v552
    %v554 = vpop.xlane.xlu0 %553
    %v555 = vsel %vm93, %v551, 0.0
    %556 = vadd.xlane.f32.xlu0 %v555
    %v557 = vpop.xlane.xlu0 %556
    %v558 = vrcp.pop 32.0
    %v559 = vmul.f32 %v554, %v558
    %v560 = vmul.f32 %v557, %v558
    %v561 = vsub.f32 %v550, %v559
    %v562 = vsub.f32 %v551, %v560
    %v563 = vmul.f32 %v561, %v561
    %v564 = vmul.f32 %v562, %v562
    %v565 = vsel %vm93, %v563, 0.0
    %566 = vadd.xlane.f32.xlu0 %v565
    %v567 = vpop.xlane.xlu0 %566
    %v568 = vsel %vm93, %v564, 0.0
    %569 = vadd.xlane.f32.xlu0 %v568
    %v570 = vpop.xlane.xlu0 %569
    %v571 = vmul.f32 %v567, %v558
    %v572 = vmul.f32 %v570, %v558
    %v573 = vadd.f32 %v571, 1e-05
    %v574 = vadd.f32 %v572, 1e-05
    %v575 = vrsqrt.pop %v573
    %v576 = vrsqrt.pop %v574
    %v577 = vmul.f32 %v561, %v575
    %v578 = vmul.f32 %v562, %v576
    %v579 = vlaneseq
    %v580 = vshrl.u32 %v579, 7
    %v581 = vsub.s32 0, %v580
    %v582 = vrot.slane %v83, %v581
    %v583 = vmul.f32 %v577, %v582
    %v584 = vmul.f32 %v578, %v582
    %v585 = vlaneseq
    %v586 = vshrl.u32 %v585, 7
    %v587 = vsub.s32 0, %v586
    %v588 = vrot.slane %v84, %v587
    %v589 = vadd.f32 %v583, %v588
    %v590 = vadd.f32 %v584, %v588
    %v591 = vlaneseq
    %v592 = vshrl.u32 %v591, 7
    %v593 = vsub.s32 0, %v592
    %v594 = vrot.slane %v85, %v593
    %v596 = vsel %vm93, %v589, 0
    %v599 = vsel %vm93, %v590, 0
    %601 = vmatprep.subr.mxu0 0.0
    %602 = vmatpush1.msra.mxu0 %v46
    %603 = vmatprep.subr.mxu0 0.0
    %604 = vmatpush1.msra.mxu0 %v47
    %605 = vmatprep.subr.mxu0 0.0
    %606 = vmatpush1.msra.mxu0 %v48
    %607 = vmatprep.subr.mxu0 0.0
    %608 = vmatpush1.msra.mxu0 %v49
    %609 = vmatprep.subr.mxu0 0.0
    %610 = vmatpush1.msra.mxu0 0.0
    %611 = vmatprep.subr.mxu0 0.0
    %612 = vmatpush1.msra.mxu0 0.0
    %613 = vmatprep.subr.mxu0 0.0
    %614 = vmatpush1.msra.mxu0 0.0
    %615 = vmatprep.subr.mxu0 0.0
    %616 = vmatpush1.msra.mxu0 0.0
    %617 = vmatprep.subr.mxu0 0.0
    %618 = vmatpush1.msra.mxu0 0.0
    %619 = vmatprep.subr.mxu0 0.0
    %620 = vmatpush1.msra.mxu0 0.0
    %621 = vmatprep.subr.mxu0 0.0
    %622 = vmatpush1.msra.mxu0 0.0
    %623 = vmatprep.subr.mxu0 0.0
    %624 = vmatpush1.msra.mxu0 0.0
    %625 = vmatprep.subr.mxu0 0.0
    %626 = vmatpush1.msra.mxu0 0.0
    %627 = vmatprep.subr.mxu0 0.0
    %628 = vmatpush1.msra.mxu0 0.0
    %629 = vmatprep.subr.mxu0 0.0
    %630 = vmatpush1.msra.mxu0 0.0
    %631 = vmatprep.subr.mxu0 0.0
    %632 = vmatpush1.msra.mxu0 0.0
    %633 = vmatprep.subr.mxu0 0.0
    %634 = vmatpush1.msra.mxu0 0.0
    %635 = vmatprep.subr.mxu0 0.0
    %636 = vmatpush1.msra.mxu0 0.0
    %637 = vmatprep.subr.mxu0 0.0
    %638 = vmatpush1.msra.mxu0 0.0
    %639 = vmatprep.subr.mxu0 0.0
    %640 = vmatpush1.msra.mxu0 0.0
    %641 = vmatprep.subr.mxu0 0.0
    %642 = vmatpush1.msra.mxu0 0.0
    %643 = vmatprep.subr.mxu0 0.0
    %644 = vmatpush1.msra.mxu0 0.0
    %645 = vmatprep.subr.mxu0 0.0
    %646 = vmatpush1.msra.mxu0 0.0
    %647 = vmatprep.subr.mxu0 0.0
    %648 = vmatpush1.msra.mxu0 0.0
    %649 = vmatprep.subr.mxu0 0.0
    %650 = vmatpush1.msra.mxu0 0.0
    %651 = vmatprep.subr.mxu0 0.0
    %652 = vmatpush1.msra.mxu0 0.0
    %653 = vmatprep.subr.mxu0 0.0
    %654 = vmatpush1.msra.mxu0 0.0
    %655 = vmatprep.subr.mxu0 0.0
    %656 = vmatpush1.msra.mxu0 0.0
    %657 = vmatprep.subr.mxu0 0.0
    %658 = vmatpush1.msra.mxu0 0.0
    %659 = vmatprep.subr.mxu0 0.0
    %660 = vmatpush1.msra.mxu0 0.0
    %661 = vmatprep.subr.mxu0 0.0
    %662 = vmatpush1.msra.mxu0 0.0
    %663 = vmatprep.subr.mxu0 0.0
    %664 = vmatpush1.msra.mxu0 0.0
    %665 = vmatprep.mubr.f32.mxu0 0.0
    %666 = vmatmul.mubr.f32.gmra.mrb[0].mxu0 %v596
    %v667 = vpop.f32.mrb[0].mxu0
    %v668 = vadd.f32 %v594, %v667
    %v669 = vpop.f32.mrb[0].mxu0
    %670 = vmatprep.mubr.f32.mxu0 0.0
    %671 = vmatmul.mubr.f32.gmra.mrb[0].mxu0 %v599
    %v672 = vpop.f32.mrb[0].mxu0
    %v673 = vadd.f32 %v594, %v672
    %v674 = vpop.f32.mrb[0].mxu0
    %675 = vdwg.mxu0
    %v676 = vmul.f32 %v668, 0.5
    %v677 = vmul.f32 %v673, 0.5
    %v678 = vtanh.pop %v676
    %v679 = vtanh.pop %v677
    %v680 = vadd.f32 %v678, 1.0
    %v681 = vadd.f32 %v679, 1.0
    %v682 = vmul.f32 %v680, 0.5
    %v683 = vmul.f32 %v681, 0.5
    %v684 = vmul.f32 %v668, %v682
    %v685 = vmul.f32 %v673, %v683
    %v686 = vlaneseq
    %v687 = vshrl.u32 %v686, 7
    %v688 = vsub.s32 0, %v687
    %v689 = vrot.slane %v86, %v688
    %vm690 = vcmask 523264
    %v692 = vsel %vm690, %v684, 0
    %v695 = vsel %vm690, %v685, 0
    %697 = vmatprep.subr.mxu0 0.0
    %698 = vmatpush1.msra.mxu0 %v50
    %699 = vmatprep.subr.mxu0 0.0
    %700 = vmatpush1.msra.mxu0 %v51
    %701 = vmatprep.subr.mxu0 0.0
    %702 = vmatpush1.msra.mxu0 %v52
    %703 = vmatprep.subr.mxu0 0.0
    %704 = vmatpush1.msra.mxu0 %v53
    %705 = vmatprep.subr.mxu0 0.0
    %706 = vmatpush1.msra.mxu0 %v54
    %707 = vmatprep.subr.mxu0 0.0
    %708 = vmatpush1.msra.mxu0 %v55
    %709 = vmatprep.subr.mxu0 0.0
    %710 = vmatpush1.msra.mxu0 %v56
    %711 = vmatprep.subr.mxu0 0.0
    %712 = vmatpush1.msra.mxu0 %v57
    %713 = vmatprep.subr.mxu0 0.0
    %714 = vmatpush1.msra.mxu0 0.0
    %715 = vmatprep.subr.mxu0 0.0
    %716 = vmatpush1.msra.mxu0 0.0
    %717 = vmatprep.subr.mxu0 0.0
    %718 = vmatpush1.msra.mxu0 0.0
    %719 = vmatprep.subr.mxu0 0.0
    %720 = vmatpush1.msra.mxu0 0.0
    %721 = vmatprep.subr.mxu0 0.0
    %722 = vmatpush1.msra.mxu0 0.0
    %723 = vmatprep.subr.mxu0 0.0
    %724 = vmatpush1.msra.mxu0 0.0
    %725 = vmatprep.subr.mxu0 0.0
    %726 = vmatpush1.msra.mxu0 0.0
    %727 = vmatprep.subr.mxu0 0.0
    %728 = vmatpush1.msra.mxu0 0.0
    %729 = vmatprep.subr.mxu0 0.0
    %730 = vmatpush1.msra.mxu0 0.0
    %731 = vmatprep.subr.mxu0 0.0
    %732 = vmatpush1.msra.mxu0 0.0
    %733 = vmatprep.subr.mxu0 0.0
    %734 = vmatpush1.msra.mxu0 0.0
    %735 = vmatprep.subr.mxu0 0.0
    %736 = vmatpush1.msra.mxu0 0.0
    %737 = vmatprep.subr.mxu0 0.0
    %738 = vmatpush1.msra.mxu0 0.0
    %739 = vmatprep.subr.mxu0 0.0
    %740 = vmatpush1.msra.mxu0 0.0
    %741 = vmatprep.subr.mxu0 0.0
    %742 = vmatpush1.msra.mxu0 0.0
    %743 = vmatprep.subr.mxu0 0.0
    %744 = vmatpush1.msra.mxu0 0.0
    %745 = vmatprep.subr.mxu0 0.0
    %746 = vmatpush1.msra.mxu0 0.0
    %747 = vmatprep.subr.mxu0 0.0
    %748 = vmatpush1.msra.mxu0 0.0
    %749 = vmatprep.subr.mxu0 0.0
    %750 = vmatpush1.msra.mxu0 0.0
    %751 = vmatprep.subr.mxu0 0.0
    %752 = vmatpush1.msra.mxu0 0.0
    %753 = vmatprep.subr.mxu0 0.0
    %754 = vmatpush1.msra.mxu0 0.0
    %755 = vmatprep.subr.mxu0 0.0
    %756 = vmatpush1.msra.mxu0 0.0
    %757 = vmatprep.subr.mxu0 0.0
    %758 = vmatpush1.msra.mxu0 0.0
    %759 = vmatprep.subr.mxu0 0.0
    %760 = vmatpush1.msra.mxu0 0.0
    %761 = vmatprep.mubr.f32.mxu0 0.0
    %762 = vmatmul.mubr.f32.gmra.mrb[0].mxu0 %v692
    %v763 = vpop.f32.mrb[0].mxu0
    %v764 = vadd.f32 %v689, %v763
    %v765 = vpop.f32.mrb[0].mxu0
    %766 = vmatprep.mubr.f32.mxu0 0.0
    %767 = vmatmul.mubr.f32.gmra.mrb[0].mxu0 %v695
    %v768 = vpop.f32.mrb[0].mxu0
    %v769 = vadd.f32 %v689, %v768
    %v770 = vpop.f32.mrb[0].mxu0
    %771 = vdwg.mxu0
    %v772 = vadd.f32 %v589, %v764
    %v773 = vadd.f32 %v590, %v769
    %v774 = vsel %vm93, %v772, 0.0
    %775 = vadd.xlane.f32.xlu0 %v774
    %v776 = vpop.xlane.xlu0 %775
    %v777 = vsel %vm93, %v773, 0.0
    %778 = vadd.xlane.f32.xlu0 %v777
    %v779 = vpop.xlane.xlu0 %778
    %v780 = vmul.f32 %v776, %v558
    %v781 = vmul.f32 %v779, %v558
    %v782 = vsub.f32 %v772, %v780
    %v783 = vsub.f32 %v773, %v781
    %v784 = vmul.f32 %v782, %v782
    %v785 = vmul.f32 %v783, %v783
    %v786 = vsel %vm93, %v784, 0.0
    %787 = vadd.xlane.f32.xlu0 %v786
    %v788 = vpop.xlane.xlu0 %787
    %v789 = vsel %vm93, %v785, 0.0
    %790 = vadd.xlane.f32.xlu0 %v789
    %v791 = vpop.xlane.xlu0 %790
    %v792 = vmul.f32 %v788, %v558
    %v793 = vmul.f32 %v791, %v558
    %v794 = vadd.f32 %v792, 1e-05
    %v795 = vadd.f32 %v793, 1e-05
    %v796 = vrsqrt.pop %v794
    %v797 = vrsqrt.pop %v795
    %v798 = vmul.f32 %v782, %v796
    %v799 = vmul.f32 %v783, %v797
    %v800 = vlaneseq
    %v801 = vshrl.u32 %v800, 7
    %v802 = vsub.s32 0, %v801
    %v803 = vrot.slane %v87, %v802
    %v804 = vmul.f32 %v798, %v803
    %v805 = vmul.f32 %v799, %v803
    %v806 = vlaneseq
    %v807 = vshrl.u32 %v806, 7
    %v808 = vsub.s32 0, %v807
    %v809 = vrot.slane %v88, %v808
    %v810 = vadd.f32 %v804, %v809
    %v811 = vadd.f32 %v805, %v809
    %812 = vst.msk [vmem:[#allocation7] sm:$0xff] %vm93, %v810
    %813 = vst.msk [vmem:[#allocation7 + $0x8] sm:$0xff] %vm93, %v811
    // Predicated region
    $region18: #{tpu_custom_call.1} parent=1 // pred_check
      _
    $region19: #{tpu_custom_call.1} parent=1 // pred_check_branch
      %815 = sbr.rel (0) target = $region21
    $region20: #{tpu_custom_call.1} parent=1 // pred_region
      %s817 = ssub.s32 256, 256
      %818 = vsyncadd [#allocation4], %s817
      %s819 = sshll.u32 [#allocation7], 4
      %s820 = int_to_ptr.vmem [resolvable:$true] %s819
      %825 = dma.vmem_to_hbm [thread:$0]  %s820, 256, %s2, [#allocation4], 128, 128, 8
    $region21: #{tpu_custom_call.1} parent=1 // pred_fallthru
      _
    // Predicated region
    $region22: #{tpu_custom_call.1} parent=1 // pred_check
      _
    $region23: #{tpu_custom_call.1} parent=1 // pred_check_branch
      %827 = sbr.rel (0) target = $region25
    $region24: #{tpu_custom_call.1} parent=1 // pred_region
      %828 = dma.done [#allocation4], 256
    $region25: #{tpu_custom_call.1} parent=1 // pred_fallthru
      _
    %829 = vsyncpa [#allocation3], 1
    %830 = vsyncpa [#allocation6], 1
    %831 = vsyncpa [#allocation4], 1

</llo_original>
